<compile_context>
chip_gen: v5e
topology: v5e:2x2
jax: 0.10.0
libtpu: 0.0.40
codegen_flags: <defaults>
</compile_context>

<pallas_src>
import functools

import jax
import jax.numpy as jnp
from jax.experimental import pallas as pl
from jax.experimental.pallas import tpu as pltpu


# ----------------------------- Pallas kernel -----------------------------

def _ds_kernel(a_ref, b_ref, c0_ref, c1_ref, d0_ref, d1_ref,
               w_ref, scale_ref, shift_ref, alpha_ref, out_ref, *, wo, cin):
    """One (image, row-tile) step: 9 tap-matmuls + fused BN/PReLU epilogue.

    a/c0/c1 blocks: (1, TR, Wo, Cin); b/d0/d1 blocks: (1, TR, Wo+1, Cin)
    w block: (9, nOut, Cin); scale/shift/alpha: (nOut, 1); out: (1, nOut, TR*Wo)
    """
    flat = lambda v: v.reshape(-1, cin)          # (TR, Wo, Cin) -> (TR*Wo, Cin)

    a = flat(a_ref[0])                           # tap (kh, kw) = (1, 1)
    c0 = flat(c0_ref[0])                         # (0, 1)
    c1 = flat(c1_ref[0])                         # (2, 1)
    b = b_ref[0]                                 # (TR, Wo+1, Cin)
    d0 = d0_ref[0]
    d1 = d1_ref[0]
    bl, br = flat(b[:, :wo, :]), flat(b[:, 1:, :])       # (1,0), (1,2)
    d0l, d0r = flat(d0[:, :wo, :]), flat(d0[:, 1:, :])   # (0,0), (0,2)
    d1l, d1r = flat(d1[:, :wo, :]), flat(d1[:, 1:, :])   # (2,0), (2,2)

    # taps[k] for k = 3*kh + kw
    taps = (d0l, c0, d0r, bl, a, br, d1l, c1, d1r)

    # (nOut, Cin) x (P_tile, Cin) -> (nOut, P_tile): contract over Cin (A @ B^T).
    dn = (((1,), (1,)), ((), ()))
    acc = jax.lax.dot_general(w_ref[0], taps[0], dn,
                              preferred_element_type=jnp.float32)
    for k in range(1, 9):
        acc = acc + jax.lax.dot_general(w_ref[k], taps[k], dn,
                                        preferred_element_type=jnp.float32)

    # Fused BatchNorm (eval) + PReLU, per output channel (= sublane row).
    z = acc * scale_ref[...] + shift_ref[...]
    out_ref[0] = jnp.where(z >= 0, z, alpha_ref[...] * z).astype(out_ref.dtype)


# ------------------------------- wrapper -----------------------------------

def _pick_row_tile(ho, wo, target_positions=1024):
    """Largest divisor TR of Ho with TR*Wo <= target and a legal lane-dense
    output block (TR*Wo multiple of 128, or the full spatial extent)."""
    divisors = [t for t in range(1, ho + 1) if ho % t == 0]
    legal = [t for t in divisors if (t * wo) % 128 == 0 or t == ho]
    fitting = [t for t in legal if t * wo <= target_positions]
    return max(fitting) if fitting else min(legal)


def downsampling_block(x_nchw, params, *, nIn, nOut):
    """DownSamplingBlock forward. x_nchw: (N, nIn, H, W) f32 -> (N, nOut, H//2, W//2)."""
    N, Cin, H, W = x_nchw.shape
    assert Cin == nIn and H % 2 == 0 and W % 2 == 0
    has_pool = nIn < nOut
    nConv = (nOut - nIn) if has_pool else nOut
    Ho, Wo = H // 2, W // 2
    P = Ho * Wo
    f32 = jnp.float32
    x = x_nchw.astype(f32)

    # ---- layout plumbing only: 2x2 phase decomposition, channels-last ----
    # phase(ph, pw)[n, i, j, c] = x[n, c, 2i+ph, 2j+pw]
    def phase(ph, pw):
        return jnp.transpose(x[:, :, ph::2, pw::2], (0, 2, 3, 1))   # (N, Ho, Wo, Cin)

    a, b, c, d = phase(0, 0), phase(0, 1), phase(1, 0), phase(1, 1)
    A = a                                                     # a[i, j]
    B = jnp.pad(b, ((0, 0), (0, 0), (1, 0), (0, 0)))          # B[i, j]  = b[i, j-1]
    Cp = jnp.pad(c, ((0, 0), (1, 0), (0, 0), (0, 0)))         # Cp[i, j] = c[i-1, j]
    Dp = jnp.pad(d, ((0, 0), (1, 0), (1, 0), (0, 0)))         # Dp[i, j] = d[i-1, j-1]
    C0, C1 = Cp[:, :Ho], Cp[:, 1:]                            # c[i-1, j], c[i, j]
    D0, D1 = Dp[:, :Ho], Dp[:, 1:]                            # d[i-1, j-1..j], d[i, j-1..j]

    # ---- per-tap weights; pool branch folded in as extra 0.25*I output rows ----
    w = params["conv_w"].astype(f32)                          # (nConv, Cin, 3, 3)
    w_taps = jnp.transpose(w, (2, 3, 0, 1)).reshape(9, nConv, Cin)   # k = 3*kh + kw
    if has_pool:
        eye = 0.25 * jnp.eye(Cin, dtype=f32)
        zero = jnp.zeros((Cin, Cin), f32)
        pool_rows = jnp.stack([eye if k in (4, 5, 7, 8) else zero for k in range(9)])
        w_aug = jnp.concatenate([w_taps, pool_rows], axis=1)  # (9, nOut, Cin)
    else:
        w_aug = w_taps                                        # nConv == nOut

    # ---- BatchNorm (eval mode, eps=1e-3) + PReLU -> per-channel affine ----
    # TODO(synk): training-mode BatchNorm (batch statistics) not implemented;
    # this matches the module in eval() with running stats.
    inv_std = 1.0 / jnp.sqrt(params["bn_var"].astype(f32) + 1e-3)
    g = params["bn_gamma"].astype(f32)
    scale = (g * inv_std).reshape(nOut, 1)
    shift = (params["bn_beta"].astype(f32)
             - params["bn_mean"].astype(f32) * g * inv_std).reshape(nOut, 1)
    alpha = params["prelu_alpha"].astype(f32).reshape(nOut, 1)

    # ---- tiling: grid = (image, output-row tile) ----
    TR = _pick_row_tile(Ho, Wo)
    nT = Ho // TR
    PT = TR * Wo

    io4 = lambda n, t: (n, t, 0, 0)
    wmap = lambda n, t: (0, 0, 0)
    vmap = lambda n, t: (0, 0)
    omap = lambda n, t: (n, 0, t)

    kernel = functools.partial(_ds_kernel, wo=Wo, cin=Cin)

    out = pl.pallas_call(
        kernel,
        out_shape=jax.ShapeDtypeStruct((N, nOut, P), f32),
        grid=(N, nT),
        in_specs=[
            pl.BlockSpec((1, TR, Wo, Cin), io4),        # A
            pl.BlockSpec((1, TR, Wo + 1, Cin), io4),    # B
            pl.BlockSpec((1, TR, Wo, Cin), io4),        # C0
            pl.BlockSpec((1, TR, Wo, Cin), io4),        # C1
            pl.BlockSpec((1, TR, Wo + 1, Cin), io4),    # D0
            pl.BlockSpec((1, TR, Wo + 1, Cin), io4),    # D1
            pl.BlockSpec((9, nOut, Cin), wmap),         # per-tap weights (+ pool rows)
            pl.BlockSpec((nOut, 1), vmap),              # scale
            pl.BlockSpec((nOut, 1), vmap),              # shift
            pl.BlockSpec((nOut, 1), vmap),              # alpha
        ],
        out_specs=pl.BlockSpec((1, nOut, PT), omap),
        compiler_params=pltpu.CompilerParams(
            dimension_semantics=("parallel", "parallel")),
    )(A, B, C0, C1, D0, D1, w_aug, scale, shift, alpha)

    return out.reshape(N, nOut, Ho, Wo)                       # free metadata reshape


# ----------------------------- reference (plain JAX) -----------------------------

def reference_forward(x_nchw, params, *, nIn, nOut):
    conv = jax.lax.conv_general_dilated(
        x_nchw, params["conv_w"], window_strides=(2, 2), padding=((1, 1), (1, 1)),
        dimension_numbers=("NCHW", "OIHW", "NCHW"))
    if nIn < nOut:
        pool = jax.lax.reduce_window(
            x_nchw, 0.0, jax.lax.add, (1, 1, 2, 2), (1, 1, 2, 2), "VALID") / 4.0
        out = jnp.concatenate([conv, pool], axis=1)
    else:
        out = conv
    g = params["bn_gamma"][None, :, None, None]
    b = params["bn_beta"][None, :, None, None]
    m = params["bn_mean"][None, :, None, None]
    v = params["bn_var"][None, :, None, None]
    a = params["prelu_alpha"][None, :, None, None]
    z = (out - m) / jnp.sqrt(v + 1e-3) * g + b
    return jnp.where(z >= 0, z, a * z)


# ------------------------------------ main ------------------------------------

def _make_params(key, nIn, nOut):
    nConv = (nOut - nIn) if nIn < nOut else nOut
    k_w, k_g, k_b, k_m, k_v, k_a = jax.random.split(key, 6)
    return {
        "conv_w": 0.1 * jax.random.normal(k_w, (nConv, nIn, 3, 3), dtype=jnp.float32),
        "bn_gamma": 1.0 + 0.1 * jax.random.normal(k_g, (nOut,), dtype=jnp.float32),
        "bn_beta": 0.05 * jax.random.normal(k_b, (nOut,), dtype=jnp.float32),
        "bn_mean": 0.1 * jax.random.normal(k_m, (nOut,), dtype=jnp.float32),
        "bn_var": jnp.abs(jax.random.normal(k_v, (nOut,), dtype=jnp.float32)) + 0.5,
        "prelu_alpha": 0.25 + 0.01 * jax.random.normal(k_a, (nOut,), dtype=jnp.float32),
    }


if __name__ == "__main__":
    key = jax.random.PRNGKey(0)
    N, H, W = 2, 16, 16

    # Config 1: nIn < nOut -> conv (nOut-nIn ch) || avg-pool (nIn ch).
    # Config 2: nIn == nOut -> conv-only branch.
    for (nIn, nOut) in ((4, 8), (8, 8)):
        key, k_x, k_p = jax.random.split(key, 3)
        x = jax.random.normal(k_x, (N, nIn, H, W), dtype=jnp.float32)
        params = _make_params(k_p, nIn, nOut)

        fwd = jax.jit(functools.partial(downsampling_block, nIn=nIn, nOut=nOut))
        y = jax.block_until_ready(fwd(x, params))
        y_ref = reference_forward(x, params, nIn=nIn, nOut=nOut)

        assert y.shape == (N, nOut, H // 2, W // 2)
        err = float(jnp.max(jnp.abs(y - y_ref)))
        assert jnp.allclose(y, y_ref, atol=1e-4, rtol=1e-4), err

    print("KERNEL_OK")
</pallas_src>

<mosaic_0001>
module attributes {stable_mosaic.version = 11 : i64} {
  func.func @_ds_kernel(%arg0: i32, %arg1: i32, %arg2: memref<1x8x8x4xf32, #tpu.memory_space<vmem>>, %arg3: memref<1x8x9x4xf32, #tpu.memory_space<vmem>>, %arg4: memref<1x8x8x4xf32, #tpu.memory_space<vmem>>, %arg5: memref<1x8x8x4xf32, #tpu.memory_space<vmem>>, %arg6: memref<1x8x9x4xf32, #tpu.memory_space<vmem>>, %arg7: memref<1x8x9x4xf32, #tpu.memory_space<vmem>>, %arg8: memref<9x8x4xf32, #tpu.memory_space<vmem>>, %arg9: memref<8x1xf32, #tpu.memory_space<vmem>>, %arg10: memref<8x1xf32, #tpu.memory_space<vmem>>, %arg11: memref<8x1xf32, #tpu.memory_space<vmem>>, %arg12: memref<1x8x64xf32, #tpu.memory_space<vmem>>) attributes {dimension_semantics = [#tpu.dimension_semantics<parallel>, #tpu.dimension_semantics<parallel>], iteration_bounds = array<i64: 2, 1>, scalar_prefetch = 0 : i64, scratch_operands = 0 : i64, tpu.core_type = #tpu.core_type<tc>, window_params = [{transform_indices = @transform_0, window_bounds = array<i64: 1, 8, 8, 4>}, {transform_indices = @transform_1, window_bounds = array<i64: 1, 8, 9, 4>}, {transform_indices = @transform_2, window_bounds = array<i64: 1, 8, 8, 4>}, {transform_indices = @transform_3, window_bounds = array<i64: 1, 8, 8, 4>}, {transform_indices = @transform_4, window_bounds = array<i64: 1, 8, 9, 4>}, {transform_indices = @transform_5, window_bounds = array<i64: 1, 8, 9, 4>}, {pipeline_mode = #tpu.pipeline_mode<synchronous>, transform_indices = @transform_6, window_bounds = array<i64: 9, 8, 4>}, {pipeline_mode = #tpu.pipeline_mode<synchronous>, transform_indices = @transform_7, window_bounds = array<i64: 8, 1>}, {pipeline_mode = #tpu.pipeline_mode<synchronous>, transform_indices = @transform_8, window_bounds = array<i64: 8, 1>}, {pipeline_mode = #tpu.pipeline_mode<synchronous>, transform_indices = @transform_9, window_bounds = array<i64: 8, 1>}, {transform_indices = @transform_10, window_bounds = array<i64: 1, 8, 64>}]} {
    %c0 = arith.constant 0 : index
    %c0_0 = arith.constant 0 : index
    %c0_1 = arith.constant 0 : index
    %c0_2 = arith.constant 0 : index
    %0 = vector.load %arg2[%c0, %c0_0, %c0_1, %c0_2] : memref<1x8x8x4xf32, #tpu.memory_space<vmem>>, vector<1x8x8x4xf32>
    %1 = vector.shape_cast %0 : vector<1x8x8x4xf32> to vector<8x8x4xf32>
    %2 = vector.shape_cast %1 : vector<8x8x4xf32> to vector<64x4xf32>
    %c0_3 = arith.constant 0 : index
    %c0_4 = arith.constant 0 : index
    %c0_5 = arith.constant 0 : index
    %c0_6 = arith.constant 0 : index
    %3 = vector.load %arg4[%c0_3, %c0_4, %c0_5, %c0_6] : memref<1x8x8x4xf32, #tpu.memory_space<vmem>>, vector<1x8x8x4xf32>
    %4 = vector.shape_cast %3 : vector<1x8x8x4xf32> to vector<8x8x4xf32>
    %5 = vector.shape_cast %4 : vector<8x8x4xf32> to vector<64x4xf32>
    %c0_7 = arith.constant 0 : index
    %c0_8 = arith.constant 0 : index
    %c0_9 = arith.constant 0 : index
    %c0_10 = arith.constant 0 : index
    %6 = vector.load %arg5[%c0_7, %c0_8, %c0_9, %c0_10] : memref<1x8x8x4xf32, #tpu.memory_space<vmem>>, vector<1x8x8x4xf32>
    %7 = vector.shape_cast %6 : vector<1x8x8x4xf32> to vector<8x8x4xf32>
    %8 = vector.shape_cast %7 : vector<8x8x4xf32> to vector<64x4xf32>
    %c0_11 = arith.constant 0 : index
    %c0_12 = arith.constant 0 : index
    %c0_13 = arith.constant 0 : index
    %c0_14 = arith.constant 0 : index
    %9 = vector.load %arg3[%c0_11, %c0_12, %c0_13, %c0_14] : memref<1x8x9x4xf32, #tpu.memory_space<vmem>>, vector<1x8x9x4xf32>
    %10 = vector.shape_cast %9 : vector<1x8x9x4xf32> to vector<8x9x4xf32>
    %c0_15 = arith.constant 0 : index
    %c0_16 = arith.constant 0 : index
    %c0_17 = arith.constant 0 : index
    %c0_18 = arith.constant 0 : index
    %11 = vector.load %arg6[%c0_15, %c0_16, %c0_17, %c0_18] : memref<1x8x9x4xf32, #tpu.memory_space<vmem>>, vector<1x8x9x4xf32>
    %12 = vector.shape_cast %11 : vector<1x8x9x4xf32> to vector<8x9x4xf32>
    %c0_19 = arith.constant 0 : index
    %c0_20 = arith.constant 0 : index
    %c0_21 = arith.constant 0 : index
    %c0_22 = arith.constant 0 : index
    %13 = vector.load %arg7[%c0_19, %c0_20, %c0_21, %c0_22] : memref<1x8x9x4xf32, #tpu.memory_space<vmem>>, vector<1x8x9x4xf32>
    %14 = vector.shape_cast %13 : vector<1x8x9x4xf32> to vector<8x9x4xf32>
    %15 = vector.extract_strided_slice %10 {offsets = [0, 0, 0], sizes = [8, 8, 4], strides = [1, 1, 1]} : vector<8x9x4xf32> to vector<8x8x4xf32>
    %16 = vector.shape_cast %15 : vector<8x8x4xf32> to vector<64x4xf32>
    %17 = vector.extract_strided_slice %10 {offsets = [0, 1, 0], sizes = [8, 8, 4], strides = [1, 1, 1]} : vector<8x9x4xf32> to vector<8x8x4xf32>
    %18 = vector.shape_cast %17 : vector<8x8x4xf32> to vector<64x4xf32>
    %19 = vector.extract_strided_slice %12 {offsets = [0, 0, 0], sizes = [8, 8, 4], strides = [1, 1, 1]} : vector<8x9x4xf32> to vector<8x8x4xf32>
    %20 = vector.shape_cast %19 : vector<8x8x4xf32> to vector<64x4xf32>
    %21 = vector.extract_strided_slice %12 {offsets = [0, 1, 0], sizes = [8, 8, 4], strides = [1, 1, 1]} : vector<8x9x4xf32> to vector<8x8x4xf32>
    %22 = vector.shape_cast %21 : vector<8x8x4xf32> to vector<64x4xf32>
    %23 = vector.extract_strided_slice %14 {offsets = [0, 0, 0], sizes = [8, 8, 4], strides = [1, 1, 1]} : vector<8x9x4xf32> to vector<8x8x4xf32>
    %24 = vector.shape_cast %23 : vector<8x8x4xf32> to vector<64x4xf32>
    %25 = vector.extract_strided_slice %14 {offsets = [0, 1, 0], sizes = [8, 8, 4], strides = [1, 1, 1]} : vector<8x9x4xf32> to vector<8x8x4xf32>
    %26 = vector.shape_cast %25 : vector<8x8x4xf32> to vector<64x4xf32>
    %c0_23 = arith.constant 0 : index
    %c0_24 = arith.constant 0 : index
    %c0_25 = arith.constant 0 : index
    %27 = vector.load %arg8[%c0_23, %c0_24, %c0_25] : memref<9x8x4xf32, #tpu.memory_space<vmem>>, vector<1x8x4xf32>
    %28 = vector.shape_cast %27 : vector<1x8x4xf32> to vector<8x4xf32>
    %cst = arith.constant dense<0.000000e+00> : vector<8x64xf32>
    %29 = tpu.matmul %28, %20, %cst {dimension_numbers = #tpu.dot_dimension_numbers<[1], [1], [0], [0], [0, 0, 1, 0], [], []>} : vector<8x4xf32>, vector<64x4xf32>, vector<8x64xf32> -> vector<8x64xf32>
    %c1 = arith.constant 1 : index
    %c0_26 = arith.constant 0 : index
    %c0_27 = arith.constant 0 : index
    %30 = vector.load %arg8[%c1, %c0_26, %c0_27] : memref<9x8x4xf32, #tpu.memory_space<vmem>>, vector<1x8x4xf32>
    %31 = vector.shape_cast %30 : vector<1x8x4xf32> to vector<8x4xf32>
    %cst_28 = arith.constant dense<0.000000e+00> : vector<8x64xf32>
    %32 = tpu.matmul %31, %5, %cst_28 {dimension_numbers = #tpu.dot_dimension_numbers<[1], [1], [0], [0], [0, 0, 1, 0], [], []>} : vector<8x4xf32>, vector<64x4xf32>, vector<8x64xf32> -> vector<8x64xf32>
    %33 = arith.addf %29, %32 : vector<8x64xf32>
    %c2 = arith.constant 2 : index
    %c0_29 = arith.constant 0 : index
    %c0_30 = arith.constant 0 : index
    %34 = vector.load %arg8[%c2, %c0_29, %c0_30] : memref<9x8x4xf32, #tpu.memory_space<vmem>>, vector<1x8x4xf32>
    %35 = vector.shape_cast %34 : vector<1x8x4xf32> to vector<8x4xf32>
    %cst_31 = arith.constant dense<0.000000e+00> : vector<8x64xf32>
    %36 = tpu.matmul %35, %22, %cst_31 {dimension_numbers = #tpu.dot_dimension_numbers<[1], [1], [0], [0], [0, 0, 1, 0], [], []>} : vector<8x4xf32>, vector<64x4xf32>, vector<8x64xf32> -> vector<8x64xf32>
    %37 = arith.addf %33, %36 : vector<8x64xf32>
    %c3 = arith.constant 3 : index
    %c0_32 = arith.constant 0 : index
    %c0_33 = arith.constant 0 : index
    %38 = vector.load %arg8[%c3, %c0_32, %c0_33] : memref<9x8x4xf32, #tpu.memory_space<vmem>>, vector<1x8x4xf32>
    %39 = vector.shape_cast %38 : vector<1x8x4xf32> to vector<8x4xf32>
    %cst_34 = arith.constant dense<0.000000e+00> : vector<8x64xf32>
    %40 = tpu.matmul %39, %16, %cst_34 {dimension_numbers = #tpu.dot_dimension_numbers<[1], [1], [0], [0], [0, 0, 1, 0], [], []>} : vector<8x4xf32>, vector<64x4xf32>, vector<8x64xf32> -> vector<8x64xf32>
    %41 = arith.addf %37, %40 : vector<8x64xf32>
    %c4 = arith.constant 4 : index
    %c0_35 = arith.constant 0 : index
    %c0_36 = arith.constant 0 : index
    %42 = vector.load %arg8[%c4, %c0_35, %c0_36] : memref<9x8x4xf32, #tpu.memory_space<vmem>>, vector<1x8x4xf32>
    %43 = vector.shape_cast %42 : vector<1x8x4xf32> to vector<8x4xf32>
    %cst_37 = arith.constant dense<0.000000e+00> : vector<8x64xf32>
    %44 = tpu.matmul %43, %2, %cst_37 {dimension_numbers = #tpu.dot_dimension_numbers<[1], [1], [0], [0], [0, 0, 1, 0], [], []>} : vector<8x4xf32>, vector<64x4xf32>, vector<8x64xf32> -> vector<8x64xf32>
    %45 = arith.addf %41, %44 : vector<8x64xf32>
    %c5 = arith.constant 5 : index
    %c0_38 = arith.constant 0 : index
    %c0_39 = arith.constant 0 : index
    %46 = vector.load %arg8[%c5, %c0_38, %c0_39] : memref<9x8x4xf32, #tpu.memory_space<vmem>>, vector<1x8x4xf32>
    %47 = vector.shape_cast %46 : vector<1x8x4xf32> to vector<8x4xf32>
    %cst_40 = arith.constant dense<0.000000e+00> : vector<8x64xf32>
    %48 = tpu.matmul %47, %18, %cst_40 {dimension_numbers = #tpu.dot_dimension_numbers<[1], [1], [0], [0], [0, 0, 1, 0], [], []>} : vector<8x4xf32>, vector<64x4xf32>, vector<8x64xf32> -> vector<8x64xf32>
    %49 = arith.addf %45, %48 : vector<8x64xf32>
    %c6 = arith.constant 6 : index
    %c0_41 = arith.constant 0 : index
    %c0_42 = arith.constant 0 : index
    %50 = vector.load %arg8[%c6, %c0_41, %c0_42] : memref<9x8x4xf32, #tpu.memory_space<vmem>>, vector<1x8x4xf32>
    %51 = vector.shape_cast %50 : vector<1x8x4xf32> to vector<8x4xf32>
    %cst_43 = arith.constant dense<0.000000e+00> : vector<8x64xf32>
    %52 = tpu.matmul %51, %24, %cst_43 {dimension_numbers = #tpu.dot_dimension_numbers<[1], [1], [0], [0], [0, 0, 1, 0], [], []>} : vector<8x4xf32>, vector<64x4xf32>, vector<8x64xf32> -> vector<8x64xf32>
    %53 = arith.addf %49, %52 : vector<8x64xf32>
    %c7 = arith.constant 7 : index
    %c0_44 = arith.constant 0 : index
    %c0_45 = arith.constant 0 : index
    %54 = vector.load %arg8[%c7, %c0_44, %c0_45] : memref<9x8x4xf32, #tpu.memory_space<vmem>>, vector<1x8x4xf32>
    %55 = vector.shape_cast %54 : vector<1x8x4xf32> to vector<8x4xf32>
    %cst_46 = arith.constant dense<0.000000e+00> : vector<8x64xf32>
    %56 = tpu.matmul %55, %8, %cst_46 {dimension_numbers = #tpu.dot_dimension_numbers<[1], [1], [0], [0], [0, 0, 1, 0], [], []>} : vector<8x4xf32>, vector<64x4xf32>, vector<8x64xf32> -> vector<8x64xf32>
    %57 = arith.addf %53, %56 : vector<8x64xf32>
    %c8 = arith.constant 8 : index
    %c0_47 = arith.constant 0 : index
    %c0_48 = arith.constant 0 : index
    %58 = vector.load %arg8[%c8, %c0_47, %c0_48] : memref<9x8x4xf32, #tpu.memory_space<vmem>>, vector<1x8x4xf32>
    %59 = vector.shape_cast %58 : vector<1x8x4xf32> to vector<8x4xf32>
    %cst_49 = arith.constant dense<0.000000e+00> : vector<8x64xf32>
    %60 = tpu.matmul %59, %26, %cst_49 {dimension_numbers = #tpu.dot_dimension_numbers<[1], [1], [0], [0], [0, 0, 1, 0], [], []>} : vector<8x4xf32>, vector<64x4xf32>, vector<8x64xf32> -> vector<8x64xf32>
    %61 = arith.addf %57, %60 : vector<8x64xf32>
    %c0_50 = arith.constant 0 : index
    %c0_51 = arith.constant 0 : index
    %62 = vector.load %arg9[%c0_50, %c0_51] : memref<8x1xf32, #tpu.memory_space<vmem>>, vector<8x1xf32>
    %63 = vector.broadcast %62 : vector<8x1xf32> to vector<8x64xf32>
    %64 = arith.mulf %61, %63 : vector<8x64xf32>
    %c0_52 = arith.constant 0 : index
    %c0_53 = arith.constant 0 : index
    %65 = vector.load %arg10[%c0_52, %c0_53] : memref<8x1xf32, #tpu.memory_space<vmem>>, vector<8x1xf32>
    %66 = vector.broadcast %65 : vector<8x1xf32> to vector<8x64xf32>
    %67 = arith.addf %64, %66 : vector<8x64xf32>
    %cst_54 = arith.constant 0.000000e+00 : f32
    %68 = vector.broadcast %cst_54 : f32 to vector<8x64xf32>
    %69 = arith.cmpf oge, %67, %68 : vector<8x64xf32>
    %c0_55 = arith.constant 0 : index
    %c0_56 = arith.constant 0 : index
    %70 = vector.load %arg11[%c0_55, %c0_56] : memref<8x1xf32, #tpu.memory_space<vmem>>, vector<8x1xf32>
    %71 = vector.broadcast %70 : vector<8x1xf32> to vector<8x64xf32>
    %72 = arith.mulf %71, %67 : vector<8x64xf32>
    %73 = arith.select %69, %67, %72 : vector<8x64xi1>, vector<8x64xf32>
    %c0_57 = arith.constant 0 : index
    %c0_58 = arith.constant 0 : index
    %c0_59 = arith.constant 0 : index
    %74 = vector.load %arg12[%c0_57, %c0_58, %c0_59] : memref<1x8x64xf32, #tpu.memory_space<vmem>>, vector<1x8x64xf32>
    %75 = vector.shape_cast %74 : vector<1x8x64xf32> to vector<8x64xf32>
    %76 = vector.shape_cast %73 : vector<8x64xf32> to vector<1x8x64xf32>
    tpu.vector_store %arg12[%c0_57, %c0_58, %c0_59], %76 {strides = array<i32>} : memref<1x8x64xf32, #tpu.memory_space<vmem>>, vector<1x8x64xf32>,
    return
  }
  func.func @transform_0(%arg0: i32, %arg1: i32) -> (i32, i32, i32, i32) {
    %c0_i32 = arith.constant 0 : i32
    %c0_i32_0 = arith.constant 0 : i32
    %c0_i32_1 = arith.constant 0 : i32
    return %arg0, %arg1, %c0_i32, %c0_i32_0 : i32, i32, i32, i32
  }
  func.func @transform_1(%arg0: i32, %arg1: i32) -> (i32, i32, i32, i32) {
    %c0_i32 = arith.constant 0 : i32
    %c0_i32_0 = arith.constant 0 : i32
    %c0_i32_1 = arith.constant 0 : i32
    return %arg0, %arg1, %c0_i32, %c0_i32_0 : i32, i32, i32, i32
  }
  func.func @transform_2(%arg0: i32, %arg1: i32) -> (i32, i32, i32, i32) {
    %c0_i32 = arith.constant 0 : i32
    %c0_i32_0 = arith.constant 0 : i32
    %c0_i32_1 = arith.constant 0 : i32
    return %arg0, %arg1, %c0_i32, %c0_i32_0 : i32, i32, i32, i32
  }
  func.func @transform_3(%arg0: i32, %arg1: i32) -> (i32, i32, i32, i32) {
    %c0_i32 = arith.constant 0 : i32
    %c0_i32_0 = arith.constant 0 : i32
    %c0_i32_1 = arith.constant 0 : i32
    return %arg0, %arg1, %c0_i32, %c0_i32_0 : i32, i32, i32, i32
  }
  func.func @transform_4(%arg0: i32, %arg1: i32) -> (i32, i32, i32, i32) {
    %c0_i32 = arith.constant 0 : i32
    %c0_i32_0 = arith.constant 0 : i32
    %c0_i32_1 = arith.constant 0 : i32
    return %arg0, %arg1, %c0_i32, %c0_i32_0 : i32, i32, i32, i32
  }
  func.func @transform_5(%arg0: i32, %arg1: i32) -> (i32, i32, i32, i32) {
    %c0_i32 = arith.constant 0 : i32
    %c0_i32_0 = arith.constant 0 : i32
    %c0_i32_1 = arith.constant 0 : i32
    return %arg0, %arg1, %c0_i32, %c0_i32_0 : i32, i32, i32, i32
  }
  func.func @transform_6(%arg0: i32, %arg1: i32) -> (i32, i32, i32) {
    %c0_i32 = arith.constant 0 : i32
    %c0_i32_0 = arith.constant 0 : i32
    %c0_i32_1 = arith.constant 0 : i32
    %c0_i32_2 = arith.constant 0 : i32
    return %c0_i32, %c0_i32_0, %c0_i32_1 : i32, i32, i32
  }
  func.func @transform_7(%arg0: i32, %arg1: i32) -> (i32, i32) {
    %c0_i32 = arith.constant 0 : i32
    %c0_i32_0 = arith.constant 0 : i32
    %c0_i32_1 = arith.constant 0 : i32
    return %c0_i32, %c0_i32_0 : i32, i32
  }
  func.func @transform_8(%arg0: i32, %arg1: i32) -> (i32, i32) {
    %c0_i32 = arith.constant 0 : i32
    %c0_i32_0 = arith.constant 0 : i32
    %c0_i32_1 = arith.constant 0 : i32
    return %c0_i32, %c0_i32_0 : i32, i32
  }
  func.func @transform_9(%arg0: i32, %arg1: i32) -> (i32, i32) {
    %c0_i32 = arith.constant 0 : i32
    %c0_i32_0 = arith.constant 0 : i32
    %c0_i32_1 = arith.constant 0 : i32
    return %c0_i32, %c0_i32_0 : i32, i32
  }
  func.func @transform_10(%arg0: i32, %arg1: i32) -> (i32, i32, i32) {
    %c0_i32 = arith.constant 0 : i32
    %c0_i32_0 = arith.constant 0 : i32
    return %arg0, %c0_i32, %arg1 : i32, i32, i32
  }
}

</mosaic_0001>

<llo_original>
// kernel: downsampling_block.1
$region0: #{downsampling_block.1}
  #allocation0 [shape = 'u32[]', space=smem, size = 0x4, offset = 0x4, fixed_abs, tag = 'smem constant byte address 0x4 - core index']
  #allocation1 [shape = 'u32[72,128]{1,0:T(1,128)}', space=vmem, size = 0x9000, scoped, tag = 'internal scratch']
  %s0 = inlined_call_operand.vmem [shape: f32[2,8,8,4], index: 0, kind: input, shape index: {}]
  %s1 = inlined_call_operand.vmem [shape: f32[2,8,9,4], index: 1, kind: input, shape index: {}]
  %s2 = inlined_call_operand.vmem [shape: f32[2,8,8,4], index: 2, kind: input, shape index: {}]
  %s3 = inlined_call_operand.vmem [shape: f32[2,8,8,4], index: 3, kind: input, shape index: {}]
  %s4 = inlined_call_operand.vmem [shape: f32[2,8,9,4], index: 4, kind: input, shape index: {}]
  %s5 = inlined_call_operand.vmem [shape: f32[2,8,9,4], index: 5, kind: input, shape index: {}]
  %s6 = inlined_call_operand.vmem [shape: f32[9,8,4], index: 6, kind: input, shape index: {}]
  %s7 = inlined_call_operand.vmem [shape: f32[8,1], index: 7, kind: input, shape index: {}]
  %s8 = inlined_call_operand.vmem [shape: f32[8,1], index: 8, kind: input, shape index: {}]
  %s9 = inlined_call_operand.vmem [shape: f32[8,1], index: 9, kind: input, shape index: {}]
  %s10 = inlined_call_operand.vmem [shape: f32[2,8,64], index: 10, kind: output, shape index: {}]
  %s11 = sld [smem:[#allocation0]]
  $region73: #{downsampling_block.1} parent=0
    _
  %s13 = ssub.s32 1, %s11
  %s14 = scalar_select 0, %s13, %s11
  loop: start=0, step=1, limit=4
  $region2: #{downsampling_block.1} parent=0 // loop_pre_header
    _
  $region3: #{downsampling_block.1} parent=0 // loop_header
    %s16 = sphi 0, %s20
    %p17 = scmp.ge.s32.totalorder %s16, 4
    %s23 = sphi 0, %s35
    %s24 = sphi 0, %s31
    %s25 = sphi 0, %s23
    %s26 = sphi 0, %s24
    %s27 = sphi 0, %s25
    %s28 = sphi 0, %s26
    %s40 = sphi 0, %s42
    %s43 = sphi 0, %s40
    %s44 = sphi 0, %s43
    %s60 = sphi 0, %s44
    %s68 = sphi 0, %s70
    %s71 = sphi 0, %s68
    %s72 = sphi 0, %s71
    %s88 = sphi 0, %s72
    %s96 = sphi 0, %s98
    %s99 = sphi 0, %s96
    %s100 = sphi 0, %s99
    %s116 = sphi 0, %s100
    %s124 = sphi 0, %s126
    %s127 = sphi 0, %s124
    %s128 = sphi 0, %s127
    %s144 = sphi 0, %s128
    %s152 = sphi 0, %s154
    %s155 = sphi 0, %s152
    %s156 = sphi 0, %s155
    %s172 = sphi 0, %s156
    %s180 = sphi 0, %s182
    %s183 = sphi 0, %s180
    %s184 = sphi 0, %s183
    %s200 = sphi 0, %s184
    %s204 = sphi 0, %s204
    %s206 = sphi 0, %s204
    %s207 = sphi 0, %s206
    %s221 = sphi 0, %s207
    %s225 = sphi 0, %s225
    %s227 = sphi 0, %s225
    %s228 = sphi 0, %s227
    %s242 = sphi 0, %s228
    %s246 = sphi 0, %s246
    %s248 = sphi 0, %s246
    %s249 = sphi 0, %s248
    %s263 = sphi 0, %s249
    %s267 = sphi 0, %s267
    %s269 = sphi 0, %s267
    %s270 = sphi 0, %s269
    %s284 = sphi 0, %s270
    %s292 = sphi 0, %s294
    %s295 = sphi 0, %s292
    %s296 = sphi 0, %s295
    %s312 = sphi 0, %s296
  $region4: #{downsampling_block.1} parent=0 // loop_header_branch
    %19 = sbr.rel (%p17) target = $region8
  $region5: #{downsampling_block.1} parent=0 // loop_body
    %s21 = ssub.s32 %s16, 1
    %s22 = ssub.s32 %s16, 2
    %s29 = sadd.s32 1, %s24
    %p30 = scmp.ge.s32.totalorder %s29, 1
    %s31 = scalar_select %p30, 0, %s29
    %s32 = sadd.s32 1, %s23
    %s33 = scalar_select %p30, %s32, %s23
    %p34 = scmp.ge.s32.totalorder %s33, 2
    %s35 = scalar_select %p34, 0, %s33
    %s36 = ssub.s32 %s23, %s35
    %s37 = ssub.s32 %s24, %s31
    %s38 = sor.u32 %s36, %s37
    %p39 = scmp.eq.s32.totalorder %s38, 0
    %s41 = sadd.s32 %s40, 1
    %s42 = scalar_select %p39, %s40, %s41
    %p45 = pneg %p39
    %p46 = scmp.eq.s32.totalorder %s16, 1
    %p47 = por %p45, %p46
    %p48 = scmp.ne.s32.totalorder %s40, %s43
    %p49 = scmp.eq.s32.totalorder %s16, 0
    %p50 = por %p48, %p49
    %p51 = scmp.ne.s32.totalorder %s40, %s43
    %p52 = scmp.eq.s32.totalorder %s21, 1
    %p53 = por %p51, %p52
    %p54 = scmp.ne.s32.totalorder %s43, %s44
    %p55 = scmp.eq.s32.totalorder %s21, 0
    %p56 = por %p54, %p55
    %p57 = scmp.ne.s32.totalorder %s43, %s44
    %p58 = scmp.eq.s32.totalorder %s22, 1
    %p59 = por %p57, %p58
    %p61 = scmp.ne.s32.totalorder %s44, %s60
    %p62 = scmp.eq.s32.totalorder %s22, 0
    %p63 = por %p61, %p62
    %s64 = ssub.s32 %s23, %s35
    %s65 = ssub.s32 %s24, %s31
    %s66 = sor.u32 %s64, %s65
    %p67 = scmp.eq.s32.totalorder %s66, 0
    %s69 = sadd.s32 %s68, 1
    %s70 = scalar_select %p67, %s68, %s69
    %p73 = pneg %p67
    %p74 = scmp.eq.s32.totalorder %s16, 1
    %p75 = por %p73, %p74
    %p76 = scmp.ne.s32.totalorder %s68, %s71
    %p77 = scmp.eq.s32.totalorder %s16, 0
    %p78 = por %p76, %p77
    %p79 = scmp.ne.s32.totalorder %s68, %s71
    %p80 = scmp.eq.s32.totalorder %s21, 1
    %p81 = por %p79, %p80
    %p82 = scmp.ne.s32.totalorder %s71, %s72
    %p83 = scmp.eq.s32.totalorder %s21, 0
    %p84 = por %p82, %p83
    %p85 = scmp.ne.s32.totalorder %s71, %s72
    %p86 = scmp.eq.s32.totalorder %s22, 1
    %p87 = por %p85, %p86
    %p89 = scmp.ne.s32.totalorder %s72, %s88
    %p90 = scmp.eq.s32.totalorder %s22, 0
    %p91 = por %p89, %p90
    %s92 = ssub.s32 %s23, %s35
    %s93 = ssub.s32 %s24, %s31
    %s94 = sor.u32 %s92, %s93
    %p95 = scmp.eq.s32.totalorder %s94, 0
    %s97 = sadd.s32 %s96, 1
    %s98 = scalar_select %p95, %s96, %s97
    %p101 = pneg %p95
    %p102 = scmp.eq.s32.totalorder %s16, 1
    %p103 = por %p101, %p102
    %p104 = scmp.ne.s32.totalorder %s96, %s99
    %p105 = scmp.eq.s32.totalorder %s16, 0
    %p106 = por %p104, %p105
    %p107 = scmp.ne.s32.totalorder %s96, %s99
    %p108 = scmp.eq.s32.totalorder %s21, 1
    %p109 = por %p107, %p108
    %p110 = scmp.ne.s32.totalorder %s99, %s100
    %p111 = scmp.eq.s32.totalorder %s21, 0
    %p112 = por %p110, %p111
    %p113 = scmp.ne.s32.totalorder %s99, %s100
    %p114 = scmp.eq.s32.totalorder %s22, 1
    %p115 = por %p113, %p114
    %p117 = scmp.ne.s32.totalorder %s100, %s116
    %p118 = scmp.eq.s32.totalorder %s22, 0
    %p119 = por %p117, %p118
    %s120 = ssub.s32 %s23, %s35
    %s121 = ssub.s32 %s24, %s31
    %s122 = sor.u32 %s120, %s121
    %p123 = scmp.eq.s32.totalorder %s122, 0
    %s125 = sadd.s32 %s124, 1
    %s126 = scalar_select %p123, %s124, %s125
    %p129 = pneg %p123
    %p130 = scmp.eq.s32.totalorder %s16, 1
    %p131 = por %p129, %p130
    %p132 = scmp.ne.s32.totalorder %s124, %s127
    %p133 = scmp.eq.s32.totalorder %s16, 0
    %p134 = por %p132, %p133
    %p135 = scmp.ne.s32.totalorder %s124, %s127
    %p136 = scmp.eq.s32.totalorder %s21, 1
    %p137 = por %p135, %p136
    %p138 = scmp.ne.s32.totalorder %s127, %s128
    %p139 = scmp.eq.s32.totalorder %s21, 0
    %p140 = por %p138, %p139
    %p141 = scmp.ne.s32.totalorder %s127, %s128
    %p142 = scmp.eq.s32.totalorder %s22, 1
    %p143 = por %p141, %p142
    %p145 = scmp.ne.s32.totalorder %s128, %s144
    %p146 = scmp.eq.s32.totalorder %s22, 0
    %p147 = por %p145, %p146
    %s148 = ssub.s32 %s23, %s35
    %s149 = ssub.s32 %s24, %s31
    %s150 = sor.u32 %s148, %s149
    %p151 = scmp.eq.s32.totalorder %s150, 0
    %s153 = sadd.s32 %s152, 1
    %s154 = scalar_select %p151, %s152, %s153
    %p157 = pneg %p151
    %p158 = scmp.eq.s32.totalorder %s16, 1
    %p159 = por %p157, %p158
    %p160 = scmp.ne.s32.totalorder %s152, %s155
    %p161 = scmp.eq.s32.totalorder %s16, 0
    %p162 = por %p160, %p161
    %p163 = scmp.ne.s32.totalorder %s152, %s155
    %p164 = scmp.eq.s32.totalorder %s21, 1
    %p165 = por %p163, %p164
    %p166 = scmp.ne.s32.totalorder %s155, %s156
    %p167 = scmp.eq.s32.totalorder %s21, 0
    %p168 = por %p166, %p167
    %p169 = scmp.ne.s32.totalorder %s155, %s156
    %p170 = scmp.eq.s32.totalorder %s22, 1
    %p171 = por %p169, %p170
    %p173 = scmp.ne.s32.totalorder %s156, %s172
    %p174 = scmp.eq.s32.totalorder %s22, 0
    %p175 = por %p173, %p174
    %s176 = ssub.s32 %s23, %s35
    %s177 = ssub.s32 %s24, %s31
    %s178 = sor.u32 %s176, %s177
    %p179 = scmp.eq.s32.totalorder %s178, 0
    %s181 = sadd.s32 %s180, 1
    %s182 = scalar_select %p179, %s180, %s181
    %p185 = pneg %p179
    %p186 = scmp.eq.s32.totalorder %s16, 1
    %p187 = por %p185, %p186
    %p188 = scmp.ne.s32.totalorder %s180, %s183
    %p189 = scmp.eq.s32.totalorder %s16, 0
    %p190 = por %p188, %p189
    %p191 = scmp.ne.s32.totalorder %s180, %s183
    %p192 = scmp.eq.s32.totalorder %s21, 1
    %p193 = por %p191, %p192
    %p194 = scmp.ne.s32.totalorder %s183, %s184
    %p195 = scmp.eq.s32.totalorder %s21, 0
    %p196 = por %p194, %p195
    %p197 = scmp.ne.s32.totalorder %s183, %s184
    %p198 = scmp.eq.s32.totalorder %s22, 1
    %p199 = por %p197, %p198
    %p201 = scmp.ne.s32.totalorder %s184, %s200
    %p202 = scmp.eq.s32.totalorder %s22, 0
    %p203 = por %p201, %p202
    %s205 = sadd.s32 %s204, 1
    %p208 = scmp.eq.s32.totalorder %s16, 1
    %p209 = scmp.ne.s32.totalorder %s204, %s206
    %p210 = scmp.eq.s32.totalorder %s16, 0
    %p211 = por %p209, %p210
    %p212 = scmp.ne.s32.totalorder %s204, %s206
    %p213 = scmp.eq.s32.totalorder %s21, 1
    %p214 = por %p212, %p213
    %p215 = scmp.ne.s32.totalorder %s206, %s207
    %p216 = scmp.eq.s32.totalorder %s21, 0
    %p217 = por %p215, %p216
    %p218 = scmp.ne.s32.totalorder %s206, %s207
    %p219 = scmp.eq.s32.totalorder %s22, 1
    %p220 = por %p218, %p219
    %p222 = scmp.ne.s32.totalorder %s207, %s221
    %p223 = scmp.eq.s32.totalorder %s22, 0
    %p224 = por %p222, %p223
    %s226 = sadd.s32 %s225, 1
    %p229 = scmp.eq.s32.totalorder %s16, 1
    %p230 = scmp.ne.s32.totalorder %s225, %s227
    %p231 = scmp.eq.s32.totalorder %s16, 0
    %p232 = por %p230, %p231
    %p233 = scmp.ne.s32.totalorder %s225, %s227
    %p234 = scmp.eq.s32.totalorder %s21, 1
    %p235 = por %p233, %p234
    %p236 = scmp.ne.s32.totalorder %s227, %s228
    %p237 = scmp.eq.s32.totalorder %s21, 0
    %p238 = por %p236, %p237
    %p239 = scmp.ne.s32.totalorder %s227, %s228
    %p240 = scmp.eq.s32.totalorder %s22, 1
    %p241 = por %p239, %p240
    %p243 = scmp.ne.s32.totalorder %s228, %s242
    %p244 = scmp.eq.s32.totalorder %s22, 0
    %p245 = por %p243, %p244
    %s247 = sadd.s32 %s246, 1
    %p250 = scmp.eq.s32.totalorder %s16, 1
    %p251 = scmp.ne.s32.totalorder %s246, %s248
    %p252 = scmp.eq.s32.totalorder %s16, 0
    %p253 = por %p251, %p252
    %p254 = scmp.ne.s32.totalorder %s246, %s248
    %p255 = scmp.eq.s32.totalorder %s21, 1
    %p256 = por %p254, %p255
    %p257 = scmp.ne.s32.totalorder %s248, %s249
    %p258 = scmp.eq.s32.totalorder %s21, 0
    %p259 = por %p257, %p258
    %p260 = scmp.ne.s32.totalorder %s248, %s249
    %p261 = scmp.eq.s32.totalorder %s22, 1
    %p262 = por %p260, %p261
    %p264 = scmp.ne.s32.totalorder %s249, %s263
    %p265 = scmp.eq.s32.totalorder %s22, 0
    %p266 = por %p264, %p265
    %s268 = sadd.s32 %s267, 1
    %p271 = scmp.eq.s32.totalorder %s16, 1
    %p272 = scmp.ne.s32.totalorder %s267, %s269
    %p273 = scmp.eq.s32.totalorder %s16, 0
    %p274 = por %p272, %p273
    %p275 = scmp.ne.s32.totalorder %s267, %s269
    %p276 = scmp.eq.s32.totalorder %s21, 1
    %p277 = por %p275, %p276
    %p278 = scmp.ne.s32.totalorder %s269, %s270
    %p279 = scmp.eq.s32.totalorder %s21, 0
    %p280 = por %p278, %p279
    %p281 = scmp.ne.s32.totalorder %s269, %s270
    %p282 = scmp.eq.s32.totalorder %s22, 1
    %p283 = por %p281, %p282
    %p285 = scmp.ne.s32.totalorder %s270, %s284
    %p286 = scmp.eq.s32.totalorder %s22, 0
    %p287 = por %p285, %p286
    %s288 = ssub.s32 %s23, %s35
    %s289 = ssub.s32 %s24, %s31
    %s290 = sor.u32 %s288, %s289
    %p291 = scmp.eq.s32.totalorder %s290, 0
    %s293 = sadd.s32 %s292, 1
    %s294 = scalar_select %p291, %s292, %s293
    %p297 = pneg %p291
    %p298 = scmp.eq.s32.totalorder %s16, 1
    %p299 = por %p297, %p298
    %p300 = scmp.ne.s32.totalorder %s292, %s295
    %p301 = scmp.eq.s32.totalorder %s16, 0
    %p302 = por %p300, %p301
    %p303 = scmp.ne.s32.totalorder %s292, %s295
    %p304 = scmp.eq.s32.totalorder %s21, 1
    %p305 = por %p303, %p304
    %p306 = scmp.ne.s32.totalorder %s295, %s296
    %p307 = scmp.eq.s32.totalorder %s21, 0
    %p308 = por %p306, %p307
    %p309 = scmp.ne.s32.totalorder %s295, %s296
    %p310 = scmp.eq.s32.totalorder %s22, 1
    %p311 = por %p309, %p310
    %p313 = scmp.ne.s32.totalorder %s296, %s312
    %p314 = scmp.eq.s32.totalorder %s22, 0
    %p315 = por %p313, %p314
    %p316 = scmp.le.s32.totalorder 1, %s16
    %p317 = scmp.lt.s32.totalorder %s16, 3
    %p318 = pnand %p316, %p317
    %p319 = pneg %p318
    // Predicated region
    $region9: #{downsampling_block.1} parent=5 // pred_check
      _
    $region10: #{downsampling_block.1} parent=5 // pred_check_branch
      %321 = sbr.rel (%p318) target = $region12
    $region11: #{downsampling_block.1} parent=5 // pred_region
      %s322 = ssub.s32 %s16, 1
      // Predicated region
      $region13: #{downsampling_block.1} parent=11 // pred_check
        %p323 = pneg %p217
      $region14: #{downsampling_block.1} parent=11 // pred_check_branch
        %325 = sbr.rel (%p323) target = $region16
      $region15: #{downsampling_block.1} parent=11 // pred_region
        _
      $region16: #{downsampling_block.1} parent=11 // pred_fallthru
        _
      // Predicated region
      $region17: #{downsampling_block.1} parent=11 // pred_check
        %p326 = pneg %p238
      $region18: #{downsampling_block.1} parent=11 // pred_check_branch
        %328 = sbr.rel (%p326) target = $region20
      $region19: #{downsampling_block.1} parent=11 // pred_region
        _
      $region20: #{downsampling_block.1} parent=11 // pred_fallthru
        _
      // Predicated region
      $region21: #{downsampling_block.1} parent=11 // pred_check
        %p329 = pneg %p259
      $region22: #{downsampling_block.1} parent=11 // pred_check_branch
        %331 = sbr.rel (%p329) target = $region24
      $region23: #{downsampling_block.1} parent=11 // pred_region
        _
      $region24: #{downsampling_block.1} parent=11 // pred_fallthru
        _
      // Predicated region
      $region25: #{downsampling_block.1} parent=11 // pred_check
        %p332 = pneg %p280
      $region26: #{downsampling_block.1} parent=11 // pred_check_branch
        %334 = sbr.rel (%p332) target = $region28
      $region27: #{downsampling_block.1} parent=11 // pred_region
        _
      $region28: #{downsampling_block.1} parent=11 // pred_fallthru
        _
    $region12: #{downsampling_block.1} parent=5 // pred_fallthru
      _
    %p335 = scmp.lt.s32.totalorder %s16, 2
    // Predicated region
    $region29: #{downsampling_block.1} parent=5 // pred_check
      %p336 = pneg %p335
    $region30: #{downsampling_block.1} parent=5 // pred_check_branch
      %338 = sbr.rel (%p336) target = $region32
    $region31: #{downsampling_block.1} parent=5 // pred_region
      // Predicated region
      $region33: #{downsampling_block.1} parent=31 // pred_check
        %p339 = pneg %p50
      $region34: #{downsampling_block.1} parent=31 // pred_check_branch
        %341 = sbr.rel (%p339) target = $region36
      $region35: #{downsampling_block.1} parent=31 // pred_region
        %s342 = smul.u32 8, %s24
        %p343 = scmp.lt.s32.totalorder %s23, 1
        %s344 = scalar_select %p343, %s23, 1
        %p345 = scmp.lt.s32.totalorder %s342, 7
        %s346 = scalar_select %p345, %s342, 7
        %s347 = smul.addr %s344, 8
        %s348 = sadd.s32 %s346, %s347
        %s349 = smul.addr %s348, 8
        %s350 = scalar_lea.vmem %s0, %s349
        %s351 = smul.u32 8, %s24
      $region36: #{downsampling_block.1} parent=31 // pred_fallthru
        _
      // Predicated region
      $region37: #{downsampling_block.1} parent=31 // pred_check
        %p352 = pneg %p78
      $region38: #{downsampling_block.1} parent=31 // pred_check_branch
        %354 = sbr.rel (%p352) target = $region40
      $region39: #{downsampling_block.1} parent=31 // pred_region
        %s355 = smul.u32 8, %s24
        %p356 = scmp.lt.s32.totalorder %s23, 1
        %s357 = scalar_select %p356, %s23, 1
        %p358 = scmp.lt.s32.totalorder %s355, 7
        %s359 = scalar_select %p358, %s355, 7
        %s360 = smul.addr %s359, 2
        %s361 = smul.addr %s357, 16
        %s362 = sadd.s32 %s360, %s361
        %s363 = smul.addr %s362, 8
        %s364 = scalar_lea.vmem %s1, %s363
        %s365 = smul.u32 8, %s24
      $region40: #{downsampling_block.1} parent=31 // pred_fallthru
        _
      // Predicated region
      $region41: #{downsampling_block.1} parent=31 // pred_check
        %p366 = pneg %p106
      $region42: #{downsampling_block.1} parent=31 // pred_check_branch
        %368 = sbr.rel (%p366) target = $region44
      $region43: #{downsampling_block.1} parent=31 // pred_region
        %s369 = smul.u32 8, %s24
        %p370 = scmp.lt.s32.totalorder %s23, 1
        %s371 = scalar_select %p370, %s23, 1
        %p372 = scmp.lt.s32.totalorder %s369, 7
        %s373 = scalar_select %p372, %s369, 7
        %s374 = smul.addr %s371, 8
        %s375 = sadd.s32 %s373, %s374
        %s376 = smul.addr %s375, 8
        %s377 = scalar_lea.vmem %s2, %s376
        %s378 = smul.u32 8, %s24
      $region44: #{downsampling_block.1} parent=31 // pred_fallthru
        _
      // Predicated region
      $region45: #{downsampling_block.1} parent=31 // pred_check
        %p379 = pneg %p134
      $region46: #{downsampling_block.1} parent=31 // pred_check_branch
        %381 = sbr.rel (%p379) target = $region48
      $region47: #{downsampling_block.1} parent=31 // pred_region
        %s382 = smul.u32 8, %s24
        %p383 = scmp.lt.s32.totalorder %s23, 1
        %s384 = scalar_select %p383, %s23, 1
        %p385 = scmp.lt.s32.totalorder %s382, 7
        %s386 = scalar_select %p385, %s382, 7
        %s387 = smul.addr %s384, 8
        %s388 = sadd.s32 %s386, %s387
        %s389 = smul.addr %s388, 8
        %s390 = scalar_lea.vmem %s3, %s389
        %s391 = smul.u32 8, %s24
      $region48: #{downsampling_block.1} parent=31 // pred_fallthru
        _
      // Predicated region
      $region49: #{downsampling_block.1} parent=31 // pred_check
        %p392 = pneg %p162
      $region50: #{downsampling_block.1} parent=31 // pred_check_branch
        %394 = sbr.rel (%p392) target = $region52
      $region51: #{downsampling_block.1} parent=31 // pred_region
        %s395 = smul.u32 8, %s24
        %p396 = scmp.lt.s32.totalorder %s23, 1
        %s397 = scalar_select %p396, %s23, 1
        %p398 = scmp.lt.s32.totalorder %s395, 7
        %s399 = scalar_select %p398, %s395, 7
        %s400 = smul.addr %s399, 2
        %s401 = smul.addr %s397, 16
        %s402 = sadd.s32 %s400, %s401
        %s403 = smul.addr %s402, 8
        %s404 = scalar_lea.vmem %s4, %s403
        %s405 = smul.u32 8, %s24
      $region52: #{downsampling_block.1} parent=31 // pred_fallthru
        _
      // Predicated region
      $region53: #{downsampling_block.1} parent=31 // pred_check
        %p406 = pneg %p190
      $region54: #{downsampling_block.1} parent=31 // pred_check_branch
        %408 = sbr.rel (%p406) target = $region56
      $region55: #{downsampling_block.1} parent=31 // pred_region
        %s409 = smul.u32 8, %s24
        %p410 = scmp.lt.s32.totalorder %s23, 1
        %s411 = scalar_select %p410, %s23, 1
        %p412 = scmp.lt.s32.totalorder %s409, 7
        %s413 = scalar_select %p412, %s409, 7
        %s414 = smul.addr %s413, 2
        %s415 = smul.addr %s411, 16
        %s416 = sadd.s32 %s414, %s415
        %s417 = smul.addr %s416, 8
        %s418 = scalar_lea.vmem %s5, %s417
        %s419 = smul.u32 8, %s24
      $region56: #{downsampling_block.1} parent=31 // pred_fallthru
        _
    $region32: #{downsampling_block.1} parent=5 // pred_fallthru
      _
    %p420 = scmp.le.s32.totalorder 1, %s16
    %p421 = scmp.lt.s32.totalorder %s16, 3
    %p422 = pnand %p420, %p421
    %p423 = pneg %p422
    // Predicated region
    $region57: #{downsampling_block.1} parent=5 // pred_check
      _
    $region58: #{downsampling_block.1} parent=5 // pred_check_branch
      %425 = sbr.rel (%p422) target = $region60
    $region59: #{downsampling_block.1} parent=5 // pred_region
      %s426 = ssub.s32 %s16, 1
      %s427 = smul.u32 8, %s26
      %p428 = scmp.lt.s32.totalorder %s25, 1
      %s429 = scalar_select %p428, %s25, 1
      %p430 = scmp.lt.s32.totalorder %s427, 7
      %s431 = scalar_select %p430, %s427, 7
      %s432 = smul.addr %s429, 8
      %s433 = sadd.s32 %s431, %s432
      %s434 = smul.addr %s433, 8
      %s435 = scalar_lea.vmem %s0, %s434
      %p436 = pneg %p56
      %p437 = pneg %p53
      %s438 = smul.u32 8, %s26
      %p439 = scmp.lt.s32.totalorder %s25, 1
      %s440 = scalar_select %p439, %s25, 1
      %p441 = scmp.lt.s32.totalorder %s438, 7
      %s442 = scalar_select %p441, %s438, 7
      %s443 = smul.addr %s442, 2
      %s444 = smul.addr %s440, 16
      %s445 = sadd.s32 %s443, %s444
      %s446 = smul.addr %s445, 8
      %s447 = scalar_lea.vmem %s1, %s446
      %p448 = pneg %p84
      %p449 = pneg %p81
      %s450 = smul.u32 8, %s26
      %p451 = scmp.lt.s32.totalorder %s25, 1
      %s452 = scalar_select %p451, %s25, 1
      %p453 = scmp.lt.s32.totalorder %s450, 7
      %s454 = scalar_select %p453, %s450, 7
      %s455 = smul.addr %s452, 8
      %s456 = sadd.s32 %s454, %s455
      %s457 = smul.addr %s456, 8
      %s458 = scalar_lea.vmem %s2, %s457
      %p459 = pneg %p112
      %p460 = pneg %p109
      %s461 = smul.u32 8, %s26
      %p462 = scmp.lt.s32.totalorder %s25, 1
      %s463 = scalar_select %p462, %s25, 1
      %p464 = scmp.lt.s32.totalorder %s461, 7
      %s465 = scalar_select %p464, %s461, 7
      %s466 = smul.addr %s463, 8
      %s467 = sadd.s32 %s465, %s466
      %s468 = smul.addr %s467, 8
      %s469 = scalar_lea.vmem %s3, %s468
      %p470 = pneg %p140
      %p471 = pneg %p137
      %s472 = smul.u32 8, %s26
      %p473 = scmp.lt.s32.totalorder %s25, 1
      %s474 = scalar_select %p473, %s25, 1
      %p475 = scmp.lt.s32.totalorder %s472, 7
      %s476 = scalar_select %p475, %s472, 7
      %s477 = smul.addr %s476, 2
      %s478 = smul.addr %s474, 16
      %s479 = sadd.s32 %s477, %s478
      %s480 = smul.addr %s479, 8
      %s481 = scalar_lea.vmem %s4, %s480
      %p482 = pneg %p168
      %p483 = pneg %p165
      %s484 = smul.u32 8, %s26
      %p485 = scmp.lt.s32.totalorder %s25, 1
      %s486 = scalar_select %p485, %s25, 1
      %p487 = scmp.lt.s32.totalorder %s484, 7
      %s488 = scalar_select %p487, %s484, 7
      %s489 = smul.addr %s488, 2
      %s490 = smul.addr %s486, 16
      %s491 = sadd.s32 %s489, %s490
      %s492 = smul.addr %s491, 8
      %s493 = scalar_lea.vmem %s5, %s492
      %p494 = pneg %p196
      %p495 = pneg %p193
      %p496 = pneg %p217
      %p497 = pneg %p214
      %p498 = pneg %p238
      %p499 = pneg %p235
      %p500 = pneg %p259
      %p501 = pneg %p256
      %p502 = pneg %p280
      %p503 = pneg %p277
      %p504 = pneg %p308
      %p505 = pneg %p305
      %p506 = scmp.lt.s32.totalorder %s25, 1
      %s507 = scalar_select %p506, %s25, 1
      %p508 = scmp.lt.s32.totalorder %s26, 0
      %s509 = scalar_select %p508, %s26, 0
      %s510 = sadd.s32 %s509, %s507
      %s511 = smul.addr %s510, 8
      %s512 = scalar_lea.vmem %s10, %s511
      %s513 = smul.u32 8, %s26
      %p514 = scmp.lt.s32.totalorder %s25, 1
      %s515 = scalar_select %p514, %s25, 1
      %p516 = scmp.lt.s32.totalorder %s513, 7
      %s517 = scalar_select %p516, %s513, 7
      %s518 = smul.addr %s515, 8
      %s519 = sadd.s32 %s517, %s518
      %s520 = smul.addr %s519, 8
      %s521 = scalar_lea.vmem %s0, %s520
      %s522 = smul.u32 8, %s26
      %s523 = smul.u32 8, %s26
      %p524 = scmp.lt.s32.totalorder %s25, 1
      %s525 = scalar_select %p524, %s25, 1
      %p526 = scmp.lt.s32.totalorder %s523, 7
      %s527 = scalar_select %p526, %s523, 7
      %s528 = smul.addr %s527, 2
      %s529 = smul.addr %s525, 16
      %s530 = sadd.s32 %s528, %s529
      %s531 = smul.addr %s530, 8
      %s532 = scalar_lea.vmem %s1, %s531
      %s533 = smul.u32 8, %s26
      %s534 = smul.u32 8, %s26
      %p535 = scmp.lt.s32.totalorder %s25, 1
      %s536 = scalar_select %p535, %s25, 1
      %p537 = scmp.lt.s32.totalorder %s534, 7
      %s538 = scalar_select %p537, %s534, 7
      %s539 = smul.addr %s536, 8
      %s540 = sadd.s32 %s538, %s539
      %s541 = smul.addr %s540, 8
      %s542 = scalar_lea.vmem %s2, %s541
      %s543 = smul.u32 8, %s26
      %s544 = smul.u32 8, %s26
      %p545 = scmp.lt.s32.totalorder %s25, 1
      %s546 = scalar_select %p545, %s25, 1
      %p547 = scmp.lt.s32.totalorder %s544, 7
      %s548 = scalar_select %p547, %s544, 7
      %s549 = smul.addr %s546, 8
      %s550 = sadd.s32 %s548, %s549
      %s551 = smul.addr %s550, 8
      %s552 = scalar_lea.vmem %s3, %s551
      %s553 = smul.u32 8, %s26
      %s554 = smul.u32 8, %s26
      %p555 = scmp.lt.s32.totalorder %s25, 1
      %s556 = scalar_select %p555, %s25, 1
      %p557 = scmp.lt.s32.totalorder %s554, 7
      %s558 = scalar_select %p557, %s554, 7
      %s559 = smul.addr %s558, 2
      %s560 = smul.addr %s556, 16
      %s561 = sadd.s32 %s559, %s560
      %s562 = smul.addr %s561, 8
      %s563 = scalar_lea.vmem %s4, %s562
      %s564 = smul.u32 8, %s26
      %s565 = smul.u32 8, %s26
      %p566 = scmp.lt.s32.totalorder %s25, 1
      %s567 = scalar_select %p566, %s25, 1
      %p568 = scmp.lt.s32.totalorder %s565, 7
      %s569 = scalar_select %p568, %s565, 7
      %s570 = smul.addr %s569, 2
      %s571 = smul.addr %s567, 16
      %s572 = sadd.s32 %s570, %s571
      %s573 = smul.addr %s572, 8
      %s574 = scalar_lea.vmem %s5, %s573
      %s575 = smul.u32 8, %s26
      %p576 = scmp.lt.s32.totalorder %s25, 1
      %s577 = scalar_select %p576, %s25, 1
      %p578 = scmp.lt.s32.totalorder %s26, 0
      %s579 = scalar_select %p578, %s26, 0
      %s580 = sadd.s32 %s579, %s577
      %s581 = smul.addr %s580, 8
      %s582 = scalar_lea.vmem %s10, %s581
      %v583 = vld [vmem:[%s521] sm:$0xff]
      %v584 = vld [vmem:[%s521 + $0x8] sm:$0xff]
      %v585 = vld [vmem:[%s521 + $0x10] sm:$0xff]
      %v586 = vld [vmem:[%s521 + $0x18] sm:$0xff]
      %v587 = vld [vmem:[%s521 + $0x20] sm:$0xff]
      %v588 = vld [vmem:[%s521 + $0x28] sm:$0xff]
      %v589 = vld [vmem:[%s521 + $0x30] sm:$0xff]
      %v590 = vld [vmem:[%s521 + $0x38] sm:$0xff]
      %v591 = vld [vmem:[%s542] sm:$0xff]
      %v592 = vld [vmem:[%s542 + $0x8] sm:$0xff]
      %v593 = vld [vmem:[%s542 + $0x10] sm:$0xff]
      %v594 = vld [vmem:[%s542 + $0x18] sm:$0xff]
      %v595 = vld [vmem:[%s542 + $0x20] sm:$0xff]
      %v596 = vld [vmem:[%s542 + $0x28] sm:$0xff]
      %v597 = vld [vmem:[%s542 + $0x30] sm:$0xff]
      %v598 = vld [vmem:[%s542 + $0x38] sm:$0xff]
      %v599 = vld [vmem:[%s552] sm:$0xff]
      %v600 = vld [vmem:[%s552 + $0x8] sm:$0xff]
      %v601 = vld [vmem:[%s552 + $0x10] sm:$0xff]
      %v602 = vld [vmem:[%s552 + $0x18] sm:$0xff]
      %v603 = vld [vmem:[%s552 + $0x20] sm:$0xff]
      %v604 = vld [vmem:[%s552 + $0x28] sm:$0xff]
      %v605 = vld [vmem:[%s552 + $0x30] sm:$0xff]
      %v606 = vld [vmem:[%s552 + $0x38] sm:$0xff]
      %v607 = vld [vmem:[%s532] sm:$0xff]
      %v608 = vld [vmem:[%s532 + $0x8] sm:$0x1]
      %v609 = vld [vmem:[%s532 + $0x10] sm:$0xff]
      %v610 = vld [vmem:[%s532 + $0x18] sm:$0x1]
      %v611 = vld [vmem:[%s532 + $0x20] sm:$0xff]
      %v612 = vld [vmem:[%s532 + $0x28] sm:$0x1]
      %v613 = vld [vmem:[%s532 + $0x30] sm:$0xff]
      %v614 = vld [vmem:[%s532 + $0x38] sm:$0x1]
      %v615 = vld [vmem:[%s532 + $0x40] sm:$0xff]
      %v616 = vld [vmem:[%s532 + $0x48] sm:$0x1]
      %v617 = vld [vmem:[%s532 + $0x50] sm:$0xff]
      %v618 = vld [vmem:[%s532 + $0x58] sm:$0x1]
      %v619 = vld [vmem:[%s532 + $0x60] sm:$0xff]
      %v620 = vld [vmem:[%s532 + $0x68] sm:$0x1]
      %v621 = vld [vmem:[%s532 + $0x70] sm:$0xff]
      %v622 = vld [vmem:[%s532 + $0x78] sm:$0x1]
      %v623 = vld [vmem:[%s563] sm:$0xff]
      %v624 = vld [vmem:[%s563 + $0x8] sm:$0x1]
      %v625 = vld [vmem:[%s563 + $0x10] sm:$0xff]
      %v626 = vld [vmem:[%s563 + $0x18] sm:$0x1]
      %v627 = vld [vmem:[%s563 + $0x20] sm:$0xff]
      %v628 = vld [vmem:[%s563 + $0x28] sm:$0x1]
      %v629 = vld [vmem:[%s563 + $0x30] sm:$0xff]
      %v630 = vld [vmem:[%s563 + $0x38] sm:$0x1]
      %v631 = vld [vmem:[%s563 + $0x40] sm:$0xff]
      %v632 = vld [vmem:[%s563 + $0x48] sm:$0x1]
      %v633 = vld [vmem:[%s563 + $0x50] sm:$0xff]
      %v634 = vld [vmem:[%s563 + $0x58] sm:$0x1]
      %v635 = vld [vmem:[%s563 + $0x60] sm:$0xff]
      %v636 = vld [vmem:[%s563 + $0x68] sm:$0x1]
      %v637 = vld [vmem:[%s563 + $0x70] sm:$0xff]
      %v638 = vld [vmem:[%s563 + $0x78] sm:$0x1]
      %v639 = vld [vmem:[%s574] sm:$0xff]
      %v640 = vld [vmem:[%s574 + $0x8] sm:$0x1]
      %v641 = vld [vmem:[%s574 + $0x10] sm:$0xff]
      %v642 = vld [vmem:[%s574 + $0x18] sm:$0x1]
      %v643 = vld [vmem:[%s574 + $0x20] sm:$0xff]
      %v644 = vld [vmem:[%s574 + $0x28] sm:$0x1]
      %v645 = vld [vmem:[%s574 + $0x30] sm:$0xff]
      %v646 = vld [vmem:[%s574 + $0x38] sm:$0x1]
      %v647 = vld [vmem:[%s574 + $0x40] sm:$0xff]
      %v648 = vld [vmem:[%s574 + $0x48] sm:$0x1]
      %v649 = vld [vmem:[%s574 + $0x50] sm:$0xff]
      %v650 = vld [vmem:[%s574 + $0x58] sm:$0x1]
      %v651 = vld [vmem:[%s574 + $0x60] sm:$0xff]
      %v652 = vld [vmem:[%s574 + $0x68] sm:$0x1]
      %v653 = vld [vmem:[%s574 + $0x70] sm:$0xff]
      %v654 = vld [vmem:[%s574 + $0x78] sm:$0x1]
      %vm671 = vcmask 1046528
      %v672 = vrot.slane %v607, 1
      %v673 = vrot.slane %v608, 1
      %v674 = vsel %vm671, %v672, %v673
      %v675 = vrot.slane %v609, 1
      %v676 = vrot.slane %v610, 1
      %v677 = vsel %vm671, %v675, %v676
      %v678 = vrot.slane %v611, 1
      %v679 = vrot.slane %v612, 1
      %v680 = vsel %vm671, %v678, %v679
      %v681 = vrot.slane %v613, 1
      %v682 = vrot.slane %v614, 1
      %v683 = vsel %vm671, %v681, %v682
      %v684 = vrot.slane %v615, 1
      %v685 = vrot.slane %v616, 1
      %v686 = vsel %vm671, %v684, %v685
      %v687 = vrot.slane %v617, 1
      %v688 = vrot.slane %v618, 1
      %v689 = vsel %vm671, %v687, %v688
      %v690 = vrot.slane %v619, 1
      %v691 = vrot.slane %v620, 1
      %v692 = vsel %vm671, %v690, %v691
      %v693 = vrot.slane %v621, 1
      %v694 = vrot.slane %v622, 1
      %v695 = vsel %vm671, %v693, %v694
      %v712 = vrot.slane %v623, 1
      %v713 = vrot.slane %v624, 1
      %v714 = vsel %vm671, %v712, %v713
      %v715 = vrot.slane %v625, 1
      %v716 = vrot.slane %v626, 1
      %v717 = vsel %vm671, %v715, %v716
      %v718 = vrot.slane %v627, 1
      %v719 = vrot.slane %v628, 1
      %v720 = vsel %vm671, %v718, %v719
      %v721 = vrot.slane %v629, 1
      %v722 = vrot.slane %v630, 1
      %v723 = vsel %vm671, %v721, %v722
      %v724 = vrot.slane %v631, 1
      %v725 = vrot.slane %v632, 1
      %v726 = vsel %vm671, %v724, %v725
      %v727 = vrot.slane %v633, 1
      %v728 = vrot.slane %v634, 1
      %v729 = vsel %vm671, %v727, %v728
      %v730 = vrot.slane %v635, 1
      %v731 = vrot.slane %v636, 1
      %v732 = vsel %vm671, %v730, %v731
      %v733 = vrot.slane %v637, 1
      %v734 = vrot.slane %v638, 1
      %v735 = vsel %vm671, %v733, %v734
      %v752 = vrot.slane %v639, 1
      %v753 = vrot.slane %v640, 1
      %v754 = vsel %vm671, %v752, %v753
      %v755 = vrot.slane %v641, 1
      %v756 = vrot.slane %v642, 1
      %v757 = vsel %vm671, %v755, %v756
      %v758 = vrot.slane %v643, 1
      %v759 = vrot.slane %v644, 1
      %v760 = vsel %vm671, %v758, %v759
      %v761 = vrot.slane %v645, 1
      %v762 = vrot.slane %v646, 1
      %v763 = vsel %vm671, %v761, %v762
      %v764 = vrot.slane %v647, 1
      %v765 = vrot.slane %v648, 1
      %v766 = vsel %vm671, %v764, %v765
      %v767 = vrot.slane %v649, 1
      %v768 = vrot.slane %v650, 1
      %v769 = vsel %vm671, %v767, %v768
      %v770 = vrot.slane %v651, 1
      %v771 = vrot.slane %v652, 1
      %v772 = vsel %vm671, %v770, %v771
      %v773 = vrot.slane %v653, 1
      %v774 = vrot.slane %v654, 1
      %v775 = vsel %vm671, %v773, %v774
      %v776 = vld [vmem:[%s6] sm:$0xff]
      %s777 = scalar_lea.vmem %s6, 8
      %v778 = vld [vmem:[%s777] sm:$0xff]
      %vm779 = vcmask 31744
      %v781 = vsel %vm779, %v778, 0
      %v784 = vsel %vm779, %v591, 0
      %v787 = vsel %vm779, %v592, 0
      %v790 = vsel %vm779, %v593, 0
      %v793 = vsel %vm779, %v594, 0
      %v796 = vsel %vm779, %v595, 0
      %v799 = vsel %vm779, %v596, 0
      %v802 = vsel %vm779, %v597, 0
      %v805 = vsel %vm779, %v598, 0
      %807 = vmatpush.xpose.msra.mxu0 0.0
      %808 = vmatpush.xpose.msra.mxu0 0.0
      %809 = vmatpush.xpose.msra.mxu0 0.0
      %810 = vmatpush.xpose.msra.mxu0 0.0
      %811 = vmatpush.xpose.msra.mxu0 0.0
      %812 = vmatpush.xpose.msra.mxu0 0.0
      %813 = vmatpush.xpose.msra.mxu0 0.0
      %814 = vmatpush.xpose.msra.mxu0 0.0
      %815 = vmatpush.xpose.msra.mxu0 %v805
      %816 = vmatpush.xpose.msra.mxu0 %v802
      %817 = vmatpush.xpose.msra.mxu0 %v799
      %818 = vmatpush.xpose.msra.mxu0 %v796
      %819 = vmatpush.xpose.msra.mxu0 %v793
      %820 = vmatpush.xpose.msra.mxu0 %v790
      %821 = vmatpush.xpose.msra.mxu0 %v787
      %822 = vmatpush.xpose.msra.mxu0 %v784
      %823 = vmatmul.f32.gmra.mxu0 %v781
      %v824 = vpop.f32.mrf.mxu0
      %v825 = vadd.f32 0.0, %v824
      %826 = vdwg.mxu0
      %v828 = vsel %vm779, %v776, 0
      %v830 = vsel %vm779, %v623, 0
      %v832 = vsel %vm779, %v625, 0
      %v834 = vsel %vm779, %v627, 0
      %v836 = vsel %vm779, %v629, 0
      %v838 = vsel %vm779, %v631, 0
      %v840 = vsel %vm779, %v633, 0
      %v842 = vsel %vm779, %v635, 0
      %v844 = vsel %vm779, %v637, 0
      %846 = vmatpush.xpose.msra.mxu0 0.0
      %847 = vmatpush.xpose.msra.mxu0 0.0
      %848 = vmatpush.xpose.msra.mxu0 0.0
      %849 = vmatpush.xpose.msra.mxu0 0.0
      %850 = vmatpush.xpose.msra.mxu0 0.0
      %851 = vmatpush.xpose.msra.mxu0 0.0
      %852 = vmatpush.xpose.msra.mxu0 0.0
      %853 = vmatpush.xpose.msra.mxu0 0.0
      %854 = vmatpush.xpose.msra.mxu0 %v844
      %855 = vmatpush.xpose.msra.mxu0 %v842
      %856 = vmatpush.xpose.msra.mxu0 %v840
      %857 = vmatpush.xpose.msra.mxu0 %v838
      %858 = vmatpush.xpose.msra.mxu0 %v836
      %859 = vmatpush.xpose.msra.mxu0 %v834
      %860 = vmatpush.xpose.msra.mxu0 %v832
      %861 = vmatpush.xpose.msra.mxu0 %v830
      %862 = vmatmul.f32.gmra.mxu0 %v828
      %v863 = vpop.f32.mrf.mxu0
      %v864 = vadd.f32 %v825, %v863
      %865 = vdwg.mxu0
      %s866 = scalar_lea.vmem %s6, 16
      %v867 = vld [vmem:[%s866] sm:$0xff]
      %v869 = vsel %vm779, %v867, 0
      %v871 = vsel %vm779, %v714, 0
      %v873 = vsel %vm779, %v717, 0
      %v875 = vsel %vm779, %v720, 0
      %v877 = vsel %vm779, %v723, 0
      %v879 = vsel %vm779, %v726, 0
      %v881 = vsel %vm779, %v729, 0
      %v883 = vsel %vm779, %v732, 0
      %v885 = vsel %vm779, %v735, 0
      %887 = vmatpush.xpose.msra.mxu0 0.0
      %888 = vmatpush.xpose.msra.mxu0 0.0
      %889 = vmatpush.xpose.msra.mxu0 0.0
      %890 = vmatpush.xpose.msra.mxu0 0.0
      %891 = vmatpush.xpose.msra.mxu0 0.0
      %892 = vmatpush.xpose.msra.mxu0 0.0
      %893 = vmatpush.xpose.msra.mxu0 0.0
      %894 = vmatpush.xpose.msra.mxu0 0.0
      %895 = vmatpush.xpose.msra.mxu0 %v885
      %896 = vmatpush.xpose.msra.mxu0 %v883
      %897 = vmatpush.xpose.msra.mxu0 %v881
      %898 = vmatpush.xpose.msra.mxu0 %v879
      %899 = vmatpush.xpose.msra.mxu0 %v877
      %900 = vmatpush.xpose.msra.mxu0 %v875
      %901 = vmatpush.xpose.msra.mxu0 %v873
      %902 = vmatpush.xpose.msra.mxu0 %v871
      %903 = vmatmul.f32.gmra.mxu0 %v869
      %v904 = vpop.f32.mrf.mxu0
      %v905 = vadd.f32 0.0, %v904
      %906 = vdwg.mxu0
      %v907 = vadd.f32 %v864, %v905
      %s908 = scalar_lea.vmem %s6, 24
      %v909 = vld [vmem:[%s908] sm:$0xff]
      %v911 = vsel %vm779, %v909, 0
      %v913 = vsel %vm779, %v607, 0
      %v915 = vsel %vm779, %v609, 0
      %v917 = vsel %vm779, %v611, 0
      %v919 = vsel %vm779, %v613, 0
      %v921 = vsel %vm779, %v615, 0
      %v923 = vsel %vm779, %v617, 0
      %v925 = vsel %vm779, %v619, 0
      %v927 = vsel %vm779, %v621, 0
      %929 = vmatpush.xpose.msra.mxu0 0.0
      %930 = vmatpush.xpose.msra.mxu0 0.0
      %931 = vmatpush.xpose.msra.mxu0 0.0
      %932 = vmatpush.xpose.msra.mxu0 0.0
      %933 = vmatpush.xpose.msra.mxu0 0.0
      %934 = vmatpush.xpose.msra.mxu0 0.0
      %935 = vmatpush.xpose.msra.mxu0 0.0
      %936 = vmatpush.xpose.msra.mxu0 0.0
      %937 = vmatpush.xpose.msra.mxu0 %v927
      %938 = vmatpush.xpose.msra.mxu0 %v925
      %939 = vmatpush.xpose.msra.mxu0 %v923
      %940 = vmatpush.xpose.msra.mxu0 %v921
      %941 = vmatpush.xpose.msra.mxu0 %v919
      %942 = vmatpush.xpose.msra.mxu0 %v917
      %943 = vmatpush.xpose.msra.mxu0 %v915
      %944 = vmatpush.xpose.msra.mxu0 %v913
      %945 = vmatmul.f32.gmra.mxu0 %v911
      %v946 = vpop.f32.mrf.mxu0
      %v947 = vadd.f32 0.0, %v946
      %948 = vdwg.mxu0
      %v949 = vadd.f32 %v907, %v947
      %s950 = scalar_lea.vmem %s6, 32
      %v951 = vld [vmem:[%s950] sm:$0xff]
      %v953 = vsel %vm779, %v951, 0
      %v956 = vsel %vm779, %v583, 0
      %v959 = vsel %vm779, %v584, 0
      %v962 = vsel %vm779, %v585, 0
      %v965 = vsel %vm779, %v586, 0
      %v968 = vsel %vm779, %v587, 0
      %v971 = vsel %vm779, %v588, 0
      %v974 = vsel %vm779, %v589, 0
      %v977 = vsel %vm779, %v590, 0
      %979 = vmatpush.xpose.msra.mxu0 0.0
      %980 = vmatpush.xpose.msra.mxu0 0.0
      %981 = vmatpush.xpose.msra.mxu0 0.0
      %982 = vmatpush.xpose.msra.mxu0 0.0
      %983 = vmatpush.xpose.msra.mxu0 0.0
      %984 = vmatpush.xpose.msra.mxu0 0.0
      %985 = vmatpush.xpose.msra.mxu0 0.0
      %986 = vmatpush.xpose.msra.mxu0 0.0
      %987 = vmatpush.xpose.msra.mxu0 %v977
      %988 = vmatpush.xpose.msra.mxu0 %v974
      %989 = vmatpush.xpose.msra.mxu0 %v971
      %990 = vmatpush.xpose.msra.mxu0 %v968
      %991 = vmatpush.xpose.msra.mxu0 %v965
      %992 = vmatpush.xpose.msra.mxu0 %v962
      %993 = vmatpush.xpose.msra.mxu0 %v959
      %994 = vmatpush.xpose.msra.mxu0 %v956
      %995 = vmatmul.f32.gmra.mxu0 %v953
      %v996 = vpop.f32.mrf.mxu0
      %v997 = vadd.f32 0.0, %v996
      %998 = vdwg.mxu0
      %v999 = vadd.f32 %v949, %v997
      %s1000 = scalar_lea.vmem %s6, 40
      %v1001 = vld [vmem:[%s1000] sm:$0xff]
      %v1003 = vsel %vm779, %v1001, 0
      %v1005 = vsel %vm779, %v674, 0
      %v1007 = vsel %vm779, %v677, 0
      %v1009 = vsel %vm779, %v680, 0
      %v1011 = vsel %vm779, %v683, 0
      %v1013 = vsel %vm779, %v686, 0
      %v1015 = vsel %vm779, %v689, 0
      %v1017 = vsel %vm779, %v692, 0
      %v1019 = vsel %vm779, %v695, 0
      %1021 = vmatpush.xpose.msra.mxu0 0.0
      %1022 = vmatpush.xpose.msra.mxu0 0.0
      %1023 = vmatpush.xpose.msra.mxu0 0.0
      %1024 = vmatpush.xpose.msra.mxu0 0.0
      %1025 = vmatpush.xpose.msra.mxu0 0.0
      %1026 = vmatpush.xpose.msra.mxu0 0.0
      %1027 = vmatpush.xpose.msra.mxu0 0.0
      %1028 = vmatpush.xpose.msra.mxu0 0.0
      %1029 = vmatpush.xpose.msra.mxu0 %v1019
      %1030 = vmatpush.xpose.msra.mxu0 %v1017
      %1031 = vmatpush.xpose.msra.mxu0 %v1015
      %1032 = vmatpush.xpose.msra.mxu0 %v1013
      %1033 = vmatpush.xpose.msra.mxu0 %v1011
      %1034 = vmatpush.xpose.msra.mxu0 %v1009
      %1035 = vmatpush.xpose.msra.mxu0 %v1007
      %1036 = vmatpush.xpose.msra.mxu0 %v1005
      %1037 = vmatmul.f32.gmra.mxu0 %v1003
      %v1038 = vpop.f32.mrf.mxu0
      %v1039 = vadd.f32 0.0, %v1038
      %1040 = vdwg.mxu0
      %v1041 = vadd.f32 %v999, %v1039
      %s1042 = scalar_lea.vmem %s6, 48
      %v1043 = vld [vmem:[%s1042] sm:$0xff]
      %v1045 = vsel %vm779, %v1043, 0
      %v1047 = vsel %vm779, %v639, 0
      %v1049 = vsel %vm779, %v641, 0
      %v1051 = vsel %vm779, %v643, 0
      %v1053 = vsel %vm779, %v645, 0
      %v1055 = vsel %vm779, %v647, 0
      %v1057 = vsel %vm779, %v649, 0
      %v1059 = vsel %vm779, %v651, 0
      %v1061 = vsel %vm779, %v653, 0
      %1063 = vmatpush.xpose.msra.mxu0 0.0
      %1064 = vmatpush.xpose.msra.mxu0 0.0
      %1065 = vmatpush.xpose.msra.mxu0 0.0
      %1066 = vmatpush.xpose.msra.mxu0 0.0
      %1067 = vmatpush.xpose.msra.mxu0 0.0
      %1068 = vmatpush.xpose.msra.mxu0 0.0
      %1069 = vmatpush.xpose.msra.mxu0 0.0
      %1070 = vmatpush.xpose.msra.mxu0 0.0
      %1071 = vmatpush.xpose.msra.mxu0 %v1061
      %1072 = vmatpush.xpose.msra.mxu0 %v1059
      %1073 = vmatpush.xpose.msra.mxu0 %v1057
      %1074 = vmatpush.xpose.msra.mxu0 %v1055
      %1075 = vmatpush.xpose.msra.mxu0 %v1053
      %1076 = vmatpush.xpose.msra.mxu0 %v1051
      %1077 = vmatpush.xpose.msra.mxu0 %v1049
      %1078 = vmatpush.xpose.msra.mxu0 %v1047
      %1079 = vmatmul.f32.gmra.mxu0 %v1045
      %v1080 = vpop.f32.mrf.mxu0
      %v1081 = vadd.f32 0.0, %v1080
      %1082 = vdwg.mxu0
      %v1083 = vadd.f32 %v1041, %v1081
      %s1084 = scalar_lea.vmem %s6, 56
      %v1085 = vld [vmem:[%s1084] sm:$0xff]
      %v1087 = vsel %vm779, %v1085, 0
      %v1090 = vsel %vm779, %v599, 0
      %v1093 = vsel %vm779, %v600, 0
      %v1096 = vsel %vm779, %v601, 0
      %v1099 = vsel %vm779, %v602, 0
      %v1102 = vsel %vm779, %v603, 0
      %v1105 = vsel %vm779, %v604, 0
      %v1108 = vsel %vm779, %v605, 0
      %v1111 = vsel %vm779, %v606, 0
      %1113 = vmatpush.xpose.msra.mxu0 0.0
      %1114 = vmatpush.xpose.msra.mxu0 0.0
      %1115 = vmatpush.xpose.msra.mxu0 0.0
      %1116 = vmatpush.xpose.msra.mxu0 0.0
      %1117 = vmatpush.xpose.msra.mxu0 0.0
      %1118 = vmatpush.xpose.msra.mxu0 0.0
      %1119 = vmatpush.xpose.msra.mxu0 0.0
      %1120 = vmatpush.xpose.msra.mxu0 0.0
      %1121 = vmatpush.xpose.msra.mxu0 %v1111
      %1122 = vmatpush.xpose.msra.mxu0 %v1108
      %1123 = vmatpush.xpose.msra.mxu0 %v1105
      %1124 = vmatpush.xpose.msra.mxu0 %v1102
      %1125 = vmatpush.xpose.msra.mxu0 %v1099
      %1126 = vmatpush.xpose.msra.mxu0 %v1096
      %1127 = vmatpush.xpose.msra.mxu0 %v1093
      %1128 = vmatpush.xpose.msra.mxu0 %v1090
      %1129 = vmatmul.f32.gmra.mxu0 %v1087
      %v1130 = vpop.f32.mrf.mxu0
      %v1131 = vadd.f32 0.0, %v1130
      %1132 = vdwg.mxu0
      %v1133 = vadd.f32 %v1083, %v1131
      %s1134 = scalar_lea.vmem %s6, 64
      %v1135 = vld [vmem:[%s1134] sm:$0xff]
      %v1137 = vsel %vm779, %v1135, 0
      %v1139 = vsel %vm779, %v754, 0
      %v1141 = vsel %vm779, %v757, 0
      %v1143 = vsel %vm779, %v760, 0
      %v1145 = vsel %vm779, %v763, 0
      %v1147 = vsel %vm779, %v766, 0
      %v1149 = vsel %vm779, %v769, 0
      %v1151 = vsel %vm779, %v772, 0
      %v1153 = vsel %vm779, %v775, 0
      %1155 = vmatpush.xpose.msra.mxu0 0.0
      %1156 = vmatpush.xpose.msra.mxu0 0.0
      %1157 = vmatpush.xpose.msra.mxu0 0.0
      %1158 = vmatpush.xpose.msra.mxu0 0.0
      %1159 = vmatpush.xpose.msra.mxu0 0.0
      %1160 = vmatpush.xpose.msra.mxu0 0.0
      %1161 = vmatpush.xpose.msra.mxu0 0.0
      %1162 = vmatpush.xpose.msra.mxu0 0.0
      %1163 = vmatpush.xpose.msra.mxu0 %v1153
      %1164 = vmatpush.xpose.msra.mxu0 %v1151
      %1165 = vmatpush.xpose.msra.mxu0 %v1149
      %1166 = vmatpush.xpose.msra.mxu0 %v1147
      %1167 = vmatpush.xpose.msra.mxu0 %v1145
      %1168 = vmatpush.xpose.msra.mxu0 %v1143
      %1169 = vmatpush.xpose.msra.mxu0 %v1141
      %1170 = vmatpush.xpose.msra.mxu0 %v1139
      %1171 = vmatmul.f32.gmra.mxu0 %v1137
      %v1172 = vpop.f32.mrf.mxu0
      %v1173 = vadd.f32 0.0, %v1172
      %1174 = vdwg.mxu0
      %v1175 = vadd.f32 %v1133, %v1173
      %v1176 = vld [vmem:[%s7] sm:$0xff]
      %1178 = vset.pattern.permute.xlu0 0
      %1179 = vperm.xlu0 %1178, %v1176
      %v1180 = vpop.permute.xlu0 %1179
      %v1182 = vmul.f32 %v1175, %v1180
      %v1183 = vld [vmem:[%s8] sm:$0xff]
      %1185 = vset.pattern.permute.xlu0 0
      %1186 = vperm.xlu0 %1185, %v1183
      %v1187 = vpop.permute.xlu0 %1186
      %v1189 = vadd.f32 %v1182, %v1187
      %vm1190 = vcmp.ge.f32.partialorder %v1189, 0.0
      %v1191 = vld [vmem:[%s9] sm:$0xff]
      %1193 = vset.pattern.permute.xlu0 0
      %1194 = vperm.xlu0 %1193, %v1191
      %v1195 = vpop.permute.xlu0 %1194
      %v1197 = vmul.f32 %v1195, %v1189
      %v1198 = vsel %vm1190, %v1189, %v1197
      %vm1199 = vcmask 523264
      %1200 = vst.msk [vmem:[%s582] sm:$0xff] %vm1199, %v1198
      %p1201 = scmp.lt.s32.totalorder %s25, 1
      %s1202 = scalar_select %p1201, %s25, 1
      %p1203 = scmp.lt.s32.totalorder %s26, 0
      %s1204 = scalar_select %p1203, %s26, 0
      %s1205 = sadd.s32 %s1204, %s1202
      %s1206 = smul.addr %s1205, 8
      %s1207 = scalar_lea.vmem %s10, %s1206
      // Predicated region
      $region61: #{downsampling_block.1} parent=59 // pred_check
        %p1208 = pneg %p305
      $region62: #{downsampling_block.1} parent=59 // pred_check_branch
        %1210 = sbr.rel (%p1208) target = $region64
      $region63: #{downsampling_block.1} parent=59 // pred_region
        _
      $region64: #{downsampling_block.1} parent=59 // pred_fallthru
        _
    $region60: #{downsampling_block.1} parent=5 // pred_fallthru
      _
    %p1211 = scmp.le.s32.totalorder 2, %s16
    // Predicated region
    $region65: #{downsampling_block.1} parent=5 // pred_check
      %p1212 = pneg %p1211
    $region66: #{downsampling_block.1} parent=5 // pred_check_branch
      %1214 = sbr.rel (%p1212) target = $region68
    $region67: #{downsampling_block.1} parent=5 // pred_region
      %s1215 = ssub.s32 %s16, 2
      // Predicated region
      $region69: #{downsampling_block.1} parent=67 // pred_check
        %p1216 = pneg %p311
      $region70: #{downsampling_block.1} parent=67 // pred_check_branch
        %1218 = sbr.rel (%p1216) target = $region72
      $region71: #{downsampling_block.1} parent=67 // pred_region
        %p1219 = scmp.lt.s32.totalorder %s27, 1
        %s1220 = scalar_select %p1219, %s27, 1
        %p1221 = scmp.lt.s32.totalorder %s28, 0
        %s1222 = scalar_select %p1221, %s28, 0
        %s1223 = sadd.s32 %s1222, %s1220
        %s1224 = smul.addr %s1223, 8
        %s1225 = scalar_lea.vmem %s10, %s1224
      $region72: #{downsampling_block.1} parent=67 // pred_fallthru
        _
    $region68: #{downsampling_block.1} parent=5 // pred_fallthru
      _
  $region6: #{downsampling_block.1} parent=0 // loop_footer
    %s20 = sadd.s32 1, %s16
  $region7: #{downsampling_block.1} parent=0 // loop_footer_branch
    %15 = sbr.rel target = $region3
  $region8: #{downsampling_block.1} parent=0 // loop_exit
    _

</llo_original>
